<compile_context>
chip_gen: v5e
topology: v5e:2x2
jax: 0.10.0
libtpu: 0.0.40
codegen_flags: <defaults>
</compile_context>

<pallas_src>
import jax
import jax.numpy as jnp
from jax.experimental import pallas as pl
from jax.experimental.pallas import tpu as pltpu

_LANES = 128
_BLOCK_BYTES = 2 * 1024 * 1024   # per-array block budget; in+out double-buffered -> 8 MiB VMEM
_MIN_GRID_STEPS = 8              # keep pipelining + v7x megacore sharding engaged
_SMALL_BYTES = 1 * 1024 * 1024   # below this a fused XLA multiply beats kernel launch overhead


def _scale_kernel(p_ref, x_ref, o_ref):
    # p_ref: (1, 1) f32 scalar parameter in SMEM.
    # x_ref / o_ref: (tile_rows, cols) VMEM tiles in the input's native dtype.
    # Multiply in the native dtype: bf16/f16 VALU is native on v6e/v7x and the
    # compiler widens internally on v5e; avoids doubling vreg pressure.
    o_ref[...] = x_ref[...] * p_ref[0, 0].astype(o_ref.dtype)


def _choose_cols(total: int) -> int:
    """Pick a lane-dense last dim (large multiple of 128) that divides total.

    Returns 0 if total is not a multiple of 128 (no pad-free lane-dense view).
    """
    for c in (1024, 512, 256, 128):
        if total % c == 0:
            return c
    return 0


def _choose_tile_rows(rows: int, cols: int, itemsize: int) -> int:
    """Row tile: as big as the VMEM budget allows while keeping >= ~8 grid steps."""
    sub = max(8, 32 // max(itemsize, 1))            # sublane packing: f32->8, bf16->16, int8->32
    cap = max(sub, (_BLOCK_BYTES // (cols * itemsize)) // sub * sub)
    target = pl.cdiv(rows, _MIN_GRID_STEPS)         # aim for >= _MIN_GRID_STEPS steps
    target = pl.cdiv(target, sub) * sub             # round up to a legal sublane multiple
    tr = min(cap, target)
    if tr >= rows:
        return rows                                 # full-extent block is always legal
    return tr


def mock_model_forward(x, param, *, force_pallas: bool = False):
    """Equivalent of MockModel.forward: return param * x (param has shape (1, 1))."""
    if x.size == 0:
        return x
    if not jnp.issubdtype(x.dtype, jnp.floating):
        # Let jnp promotion handle non-float inputs (mirrors torch's float promotion).
        return param.reshape(()) * x

    total = int(x.size)
    itemsize = jnp.dtype(x.dtype).itemsize

    if not force_pallas and total * itemsize < _SMALL_BYTES:
        # Too small to amortize pallas_call launch + DMA setup; XLA fuses this for free.
        return (param.reshape(()).astype(x.dtype) * x).astype(x.dtype)

    cols = _choose_cols(total)
    if cols == 0:
        # Ragged total (< 128-aligned): pad + slice would ~3x HBM traffic for a
        # memory-bound op, so use the fused XLA multiply (already at roofline).
        return (param.reshape(()).astype(x.dtype) * x).astype(x.dtype)

    rows = total // cols
    x2d = jnp.reshape(x, (rows, cols))              # free: contiguous row-major reshape
    tile_rows = _choose_tile_rows(rows, cols, itemsize)
    grid = (pl.cdiv(rows, tile_rows),)

    out2d = pl.pallas_call(
        _scale_kernel,
        out_shape=jax.ShapeDtypeStruct((rows, cols), x.dtype),
        grid_spec=pl.GridSpec(
            grid=grid,
            in_specs=[
                pl.BlockSpec(memory_space=pltpu.MemorySpace.SMEM),   # param (1,1) f32 scalar
                pl.BlockSpec((tile_rows, cols), lambda i: (i, 0)),   # x tile
            ],
            out_specs=pl.BlockSpec((tile_rows, cols), lambda i: (i, 0)),
        ),
        compiler_params=pltpu.CompilerParams(
            dimension_semantics=("parallel",)),      # megacore-shard tiles on v7x
    )(param.astype(jnp.float32).reshape(1, 1), x2d)

    return out2d.reshape(x.shape)


if __name__ == "__main__":
    key = jax.random.PRNGKey(0)
    k1, k2 = jax.random.split(key)

    # Deterministic parameter init matching nn.Parameter(pt.ones(1, 1)).
    param = jnp.ones((1, 1), dtype=jnp.float32)

    # Small NCHW input consistent with "input images": batch=2, channels=4, 16x16.
    x_small = jax.random.normal(k1, (2, 4, 16, 16), dtype=jnp.float32)
    y_fast = mock_model_forward(x_small, param)                        # small-input XLA path
    y_pallas = mock_model_forward(x_small, param, force_pallas=True)   # Pallas path
    jax.block_until_ready((y_fast, y_pallas))
    ref = param[0, 0] * x_small
    assert y_pallas.shape == x_small.shape and y_pallas.dtype == x_small.dtype
    assert bool(jnp.allclose(y_pallas, ref))
    assert bool(jnp.allclose(y_fast, ref))

    # bf16 input exercising the multi-block grid and native bf16 compute path.
    x_bf16 = jax.random.normal(k2, (2, 4, 64, 128), dtype=jnp.bfloat16)
    y_bf16 = mock_model_forward(x_bf16, param, force_pallas=True)
    y_bf16 = jax.block_until_ready(y_bf16)
    assert y_bf16.shape == x_bf16.shape and y_bf16.dtype == x_bf16.dtype
    assert bool(jnp.allclose(y_bf16.astype(jnp.float32), x_bf16.astype(jnp.float32)))

    print("KERNEL_OK")
</pallas_src>

<mosaic_0001>
module attributes {stable_mosaic.version = 11 : i64} {
  func.func @_scale_kernel(%arg0: i32, %arg1: memref<1x1xf32, #tpu.memory_space<smem>>, %arg2: memref<2x1024xf32, #tpu.memory_space<vmem>>, %arg3: memref<2x1024xf32, #tpu.memory_space<vmem>>) attributes {dimension_semantics = [#tpu.dimension_semantics<parallel>], iteration_bounds = array<i64: 1>, scalar_prefetch = 0 : i64, scratch_operands = 0 : i64, tpu.core_type = #tpu.core_type<tc>, window_params = [{transform_indices = @transform_0, window_bounds = array<i64: 1, 1>}, {transform_indices = @transform_1, window_bounds = array<i64: 2, 1024>}, {transform_indices = @transform_2, window_bounds = array<i64: 2, 1024>}]} {
    %c0 = arith.constant 0 : index
    %c0_0 = arith.constant 0 : index
    %0 = vector.load %arg2[%c0, %c0_0] : memref<2x1024xf32, #tpu.memory_space<vmem>>, vector<2x1024xf32>
    %c0_1 = arith.constant 0 : index
    %c0_2 = arith.constant 0 : index
    %1 = memref.load %arg1[%c0_1, %c0_2] : memref<1x1xf32, #tpu.memory_space<smem>>
    %2 = vector.broadcast %1 : f32 to vector<2x1024xf32>
    %3 = arith.mulf %0, %2 : vector<2x1024xf32>
    %c0_3 = arith.constant 0 : index
    %c0_4 = arith.constant 0 : index
    %4 = vector.load %arg3[%c0_3, %c0_4] : memref<2x1024xf32, #tpu.memory_space<vmem>>, vector<2x1024xf32>
    tpu.vector_store %arg3[%c0_3, %c0_4], %3 {strides = array<i32>} : memref<2x1024xf32, #tpu.memory_space<vmem>>, vector<2x1024xf32>,
    return
  }
  func.func @transform_0(%arg0: i32) -> (i32, i32) {
    %c0_i32 = arith.constant 0 : i32
    %c0_i32_0 = arith.constant 0 : i32
    %c0_i32_1 = arith.constant 0 : i32
    return %c0_i32, %c0_i32_0 : i32, i32
  }
  func.func @transform_1(%arg0: i32) -> (i32, i32) {
    %c0_i32 = arith.constant 0 : i32
    %c0_i32_0 = arith.constant 0 : i32
    return %arg0, %c0_i32 : i32, i32
  }
  func.func @transform_2(%arg0: i32) -> (i32, i32) {
    %c0_i32 = arith.constant 0 : i32
    %c0_i32_0 = arith.constant 0 : i32
    return %arg0, %c0_i32 : i32, i32
  }
}

</mosaic_0001>

<llo_original>
// kernel: tpu_custom_call.1
$region0: #{tpu_custom_call.1}
  #allocation0 [shape = 'u32[]', space=smem, size = 0x4, offset = 0x4, fixed_abs, tag = 'smem constant byte address 0x4 - core index']
  #allocation1 [shape = 'u32[72,128]{1,0:T(1,128)}', space=vmem, size = 0x9000, scoped, tag = 'internal scratch']
  #allocation2 [shape = 'f32[1,1]{1,0:T(1,128)S(6)}', space=smem, size = 0x200, scoped, tag = 'scoped memory for tpu_custom_call.1']
  %s0 = inlined_call_operand.<no memory space> [shape: f32[1,1], index: 0, kind: input, shape index: {}]
  %s1 = inlined_call_operand.hbm [shape: f32[2,1024], index: 1, kind: input, shape index: {}]
  %s2 = inlined_call_operand.hbm [shape: f32[2,1024], index: 2, kind: output, shape index: {}]
  %s3 = sld [smem:[#allocation0]]
  $region22: #{tpu_custom_call.1} parent=0
    _
  %s5 = ssub.s32 1, %s3
  %s6 = scalar_select 0, %s5, %s3
  %7 = sst [smem:[#allocation2]] %s0
  $region1: #{tpu_custom_call.1} parent=0
    #allocation3 [shape = 'u8[8192]{0}', space=vmem, size = 0x2000, scoped, tag = 'input window, operand 1, single buffered']
    #allocation4 [shape = 's32[1]{0}', space=sflag, size = 0x4, scoped, tag = 'scoped memory for tpu_custom_call.1']
    #allocation5 [shape = 's32[1]{0}', space=sflag, size = 0x4, scoped, tag = 'scoped memory for tpu_custom_call.1']
    #allocation6 [shape = 'u8[8192]{0}', space=vmem, size = 0x2000, scoped, tag = 'output window, operand 0, single buffered']
    %8 = vsyncpa [#allocation4], 0
    %9 = vsyncpa [#allocation5], 0
    // Predicated region
    $region2: #{tpu_custom_call.1} parent=1 // pred_check
      _
    $region3: #{tpu_custom_call.1} parent=1 // pred_check_branch
      %11 = sbr.rel (0) target = $region5
    $region4: #{tpu_custom_call.1} parent=1 // pred_region
      _
    $region5: #{tpu_custom_call.1} parent=1 // pred_fallthru
      _
    // Predicated region
    $region6: #{tpu_custom_call.1} parent=1 // pred_check
      _
    $region7: #{tpu_custom_call.1} parent=1 // pred_check_branch
      %13 = sbr.rel (0) target = $region9
    $region8: #{tpu_custom_call.1} parent=1 // pred_region
      %15 = vsyncadd [#allocation4], 0
      %s17 = sshll.u32 %s1, 4
      %s18 = int_to_ptr.hbm [resolvable:$true] %s17
      %s19 = sshll.u32 [#allocation3], 4
      %s20 = int_to_ptr.vmem [resolvable:$true] %s19
      %22 = dma.hbm_to_vmem [thread:$0]  %s18, 256, %s20, [#allocation4]
    $region9: #{tpu_custom_call.1} parent=1 // pred_fallthru
      _
    // Predicated region
    $region10: #{tpu_custom_call.1} parent=1 // pred_check
      _
    $region11: #{tpu_custom_call.1} parent=1 // pred_check_branch
      %24 = sbr.rel (0) target = $region13
    $region12: #{tpu_custom_call.1} parent=1 // pred_region
      %26 = dma.done [#allocation4], 256
    $region13: #{tpu_custom_call.1} parent=1 // pred_fallthru
      _
    %v27 = vld [vmem:[#allocation3] sm:$0xff]
    %v28 = vld [vmem:[#allocation3 + $0x8] sm:$0xff]
    %s29 = sld [smem:[#allocation2]]
    %v30 = vstv %s29
    %v31 = vmul.f32 %v27, %v30
    %v32 = vmul.f32 %v28, %v30
    %33 = vst [vmem:[#allocation6] sm:$0xff] %v31
    %34 = vst [vmem:[#allocation6 + $0x8] sm:$0xff] %v32
    // Predicated region
    $region14: #{tpu_custom_call.1} parent=1 // pred_check
      _
    $region15: #{tpu_custom_call.1} parent=1 // pred_check_branch
      %36 = sbr.rel (0) target = $region17
    $region16: #{tpu_custom_call.1} parent=1 // pred_region
      %38 = vsyncadd [#allocation5], 0
      %s40 = sshll.u32 [#allocation6], 4
      %s41 = int_to_ptr.vmem [resolvable:$true] %s40
      %s42 = sshll.u32 %s2, 4
      %s43 = int_to_ptr.hbm [resolvable:$true] %s42
      %45 = dma.vmem_to_hbm [thread:$0]  %s41, 256, %s43, [#allocation5]
    $region17: #{tpu_custom_call.1} parent=1 // pred_fallthru
      _
    // Predicated region
    $region18: #{tpu_custom_call.1} parent=1 // pred_check
      _
    $region19: #{tpu_custom_call.1} parent=1 // pred_check_branch
      %47 = sbr.rel (0) target = $region21
    $region20: #{tpu_custom_call.1} parent=1 // pred_region
      %49 = dma.done [#allocation5], 256
    $region21: #{tpu_custom_call.1} parent=1 // pred_fallthru
      _
    %50 = vsyncpa [#allocation4], 1
    %51 = vsyncpa [#allocation5], 1

</llo_original>
